<compile_context>
chip_gen: v7x
topology: tpu7x:2x2x1
jax: 0.10.0
libtpu: 0.0.40
codegen_flags: <defaults>
</compile_context>

<pallas_src>
import numpy as np
import jax
import jax.numpy as jnp
from jax.experimental import pallas as pl
from jax.experimental.pallas import tpu as pltpu

# ----------------------------- model config ---------------------------------
VOCAB = 27          # '_ACDEFGHIKLMNPQRSTVWYXBZJUO'
ALPHABET = 21       # pseudo-one-hot channels
KERNEL_SIZES = [3, 5]
N_FILTERS = 16
HIDDEN = 32
N_CLASSES = 8
BATCH = 2
SEQ_LEN = 16

_SELU_ALPHA = 1.6732632423543772848170429916717
_SELU_SCALE = 1.0507009873554804934193349852946


def _selu(x):
    return _SELU_SCALE * jnp.where(x > 0, x, _SELU_ALPHA * (jnp.exp(x) - 1.0))


def _pseudo_one_hot_table():
    """(27, 21) table reproducing PseudoOneHotEncoding exactly."""
    t = np.zeros((VOCAB, ALPHABET), dtype=np.float32)
    for i in range(1, 22):          # A..X get plain one-hot
        t[i, i - 1] = 1.0
    t[22, 2], t[22, 11] = 0.5, 0.5  # B = 0.5 D + 0.5 N
    t[23, 3], t[23, 13] = 0.5, 0.5  # Z = 0.5 E + 0.5 Q
    t[24, 7], t[24, 9] = 0.5, 0.5   # J = 0.5 I + 0.5 L
    # rows 0 ('_'), 25 ('U'), 26 ('O') stay all-zero (dropped by the slicing)
    return t


# ------------------------------- kernel --------------------------------------
def _make_kernel(B, L, kernel_sizes, F, H, C):
    nb = len(kernel_sizes)
    in_feats = nb * F
    # lane offset of each branch's tap block inside W_all
    offs, o = [], 0
    for k in kernel_sizes:
        offs.append(o)
        o += k * F
    ntot = o                        # = sum(k) * F = 128 for the default config

    def kernel(seq_ref, w_all_ref, wpack_ref, bias_ref, out_ref):
        # ---- pseudo-one-hot (table already folded into W_all) --------------
        seq = seq_ref[...]                                           # (B*L, 1) int32
        iota = jax.lax.broadcasted_iota(jnp.int32, (B * L, VOCAB), 1)
        onehot = (seq == iota).astype(jnp.float32)                   # (B*L, 27)

        # ---- one fused, lane-filling matmul: all taps of all branches ------
        proj = jnp.dot(onehot, w_all_ref[...],
                       preferred_element_type=jnp.float32)           # (B*L, 128)
        proj = proj.reshape(B, L, ntot)                              # (B, L, 128)

        bias_all = bias_ref[...]                                     # (1, nb*F+H+C)

        # ---- conv branches: shifted-slice adds + SELU + max-pool -----------
        feats = []
        for bi, k in enumerate(kernel_sizes):
            lout = L - k + 1
            off = offs[bi]
            acc = proj[:, 0:lout, off:off + F]                       # tap 0
            for j in range(1, k):
                acc = acc + proj[:, j:j + lout,
                                 off + j * F:off + (j + 1) * F]
            act = _selu(acc + bias_all[:, bi * F:(bi + 1) * F])      # (B, lout, F)
            feats.append(jnp.max(act, axis=1))                       # (B, F)

        feat = jnp.concatenate(feats, axis=1)                        # (B, nb*F)

        # ---- MLP head (dropout is inference-mode identity) -----------------
        # TODO(synk): training-mode dropout (p=0.3) not implemented (eval semantics).
        wpack = wpack_ref[...]                                       # (in_feats+H, max(H,C))
        lin_w = wpack[0:in_feats, 0:H]                               # (in_feats, H)
        cls_w = wpack[in_feats:in_feats + H, 0:C]                    # (H, C)
        lin_b = bias_all[:, in_feats:in_feats + H]                   # (1, H)
        cls_b = bias_all[:, in_feats + H:in_feats + H + C]           # (1, C)

        h = _selu(jnp.dot(feat, lin_w,
                          preferred_element_type=jnp.float32) + lin_b)
        out_ref[...] = jnp.dot(h, cls_w,
                               preferred_element_type=jnp.float32) + cls_b

    return kernel


def deepfam_ablation2(seq_tokens, table, conv_ws, conv_bs, lin_w, lin_b, cls_w, cls_b):
    B, L = seq_tokens.shape
    nb = len(conv_ws)
    F = conv_ws[0].shape[-1]
    H = lin_w.shape[-1]
    C = cls_w.shape[-1]
    in_feats = nb * F
    kernel_sizes = [int(w.shape[0]) for w in conv_ws]

    # Fold the encoding table into the conv weights and fuse all taps of all
    # branches along the output axis: columns [off_bi + j*F : off_bi + (j+1)*F]
    # of W_all hold table @ W_tap[bi][j].  Exact (everything before SELU is linear).
    w_all = jnp.concatenate(
        [jnp.dot(table, w[j], precision=jax.lax.Precision.HIGHEST)
         for w in conv_ws for j in range(int(w.shape[0]))],
        axis=1)                                                      # (27, sum_k k*F)

    # Pack the two linear layers into one buffer (sublane concat).
    wpack = jnp.zeros((in_feats + H, max(H, C)), jnp.float32)
    wpack = wpack.at[:in_feats, :H].set(lin_w)
    wpack = wpack.at[in_feats:, :C].set(cls_w)

    # Pack all biases into a single row: [conv biases | lin_b | cls_b].
    bias_pack = jnp.concatenate(list(conv_bs) + [lin_b, cls_b], axis=1)  # (1, nb*F+H+C)

    seq_col = seq_tokens.reshape(B * L, 1).astype(jnp.int32)

    kernel = _make_kernel(B, L, kernel_sizes, F, H, C)
    vmem = pltpu.MemorySpace.VMEM
    # TODO(synk): at production batch sizes, add a batch grid with
    # compiler_params=pltpu.CompilerParams(dimension_semantics=("parallel",))
    # so v7x's two TensorCores share the work; at B=2 a grid is pure overhead.
    return pl.pallas_call(
        kernel,
        out_shape=jax.ShapeDtypeStruct((B, C), jnp.float32),
        in_specs=[pl.BlockSpec(memory_space=vmem)] * 4,
        out_specs=pl.BlockSpec(memory_space=vmem),
    )(seq_col, w_all, wpack, bias_pack)


# ---------------------------- pure-JAX reference -----------------------------
def reference(seq_tokens, table, conv_ws, conv_bs, lin_w, lin_b, cls_w, cls_b):
    B, L = seq_tokens.shape
    enc = table[seq_tokens]                            # (B, L, A)
    feats = []
    for w, b in zip(conv_ws, conv_bs):
        k, _, F = w.shape
        lout = L - k + 1
        acc = jnp.zeros((B, lout, F), jnp.float32)
        for j in range(k):
            acc = acc + jnp.einsum('bla,af->blf', enc[:, j:j + lout, :], w[j])
        feats.append(jnp.max(_selu(acc + b), axis=1))  # (B, F)
    feat = jnp.concatenate(feats, axis=1)
    h = _selu(feat @ lin_w + lin_b)
    return h @ cls_w + cls_b


# --------------------------------- main ---------------------------------------
if __name__ == "__main__":
    key = jax.random.PRNGKey(0)
    k_seq, k_conv, k_lin, k_linb, k_cls = jax.random.split(key, 5)

    # deterministic "SELU-init" parameters (shapes from the module __init__)
    table = jnp.asarray(_pseudo_one_hot_table())
    conv_ws, conv_bs = [], []
    conv_keys = jax.random.split(k_conv, len(KERNEL_SIZES))
    for ck, ks in zip(conv_keys, KERNEL_SIZES):
        # torch weight (F, A, k) ~ N(0, sqrt(1/k)); stored here tap-major (k, A, F)
        conv_ws.append(jax.random.normal(ck, (ks, ALPHABET, N_FILTERS),
                                         jnp.float32) * np.sqrt(1.0 / ks))
        conv_bs.append(jnp.full((1, N_FILTERS), 0.01, jnp.float32))

    in_feats = N_FILTERS * len(KERNEL_SIZES)
    lin_w = jax.random.normal(k_lin, (in_feats, HIDDEN),
                              jnp.float32) * np.sqrt(1.0 / in_feats)
    lin_b = (jax.random.uniform(k_linb, (1, HIDDEN), jnp.float32,
                                -1.0, 1.0) / np.sqrt(in_feats)).astype(jnp.float32)
    cls_w = jax.random.normal(k_cls, (HIDDEN, N_CLASSES),
                              jnp.float32) * np.sqrt(1.0 / HIDDEN)
    cls_b = jnp.full((1, N_CLASSES), 0.01, jnp.float32)

    # token ids in [0, 27)
    seq_tokens = jax.random.randint(k_seq, (BATCH, SEQ_LEN), 0, VOCAB, jnp.int32)

    out = deepfam_ablation2(seq_tokens, table, conv_ws, conv_bs,
                            lin_w, lin_b, cls_w, cls_b)
    out = jax.block_until_ready(out)

    ref = reference(seq_tokens, table, conv_ws, conv_bs,
                    lin_w, lin_b, cls_w, cls_b)
    np.testing.assert_allclose(np.asarray(out), np.asarray(ref),
                               rtol=1e-4, atol=1e-4)
    print("KERNEL_OK")
</pallas_src>

<mosaic_0001>
module attributes {stable_mosaic.version = 11 : i64} {
  func.func @kernel(%arg0: memref<32x1xi32, #tpu.memory_space<vmem>>, %arg1: memref<27x128xf32, #tpu.memory_space<vmem>>, %arg2: memref<64x32xf32, #tpu.memory_space<vmem>>, %arg3: memref<1x72xf32, #tpu.memory_space<vmem>>, %arg4: memref<2x8xf32, #tpu.memory_space<vmem>>) attributes {dimension_semantics = [], scalar_prefetch = 0 : i64, scratch_operands = 0 : i64, tpu.core_type = #tpu.core_type<tc>} {
    %c0 = arith.constant 0 : index
    %c0_0 = arith.constant 0 : index
    %0 = vector.load %arg0[%c0, %c0_0] : memref<32x1xi32, #tpu.memory_space<vmem>>, vector<32x1xi32>
    %1 = tpu.iota {dimensions = array<i32: 1>} : vector<32x27xi32>
    %2 = vector.broadcast %0 : vector<32x1xi32> to vector<32x27xi32>
    %3 = arith.cmpi eq, %2, %1 : vector<32x27xi32>
    %4 = arith.extui %3 : vector<32x27xi1> to vector<32x27xi32>
    %5 = arith.sitofp %4 : vector<32x27xi32> to vector<32x27xf32>
    %c0_1 = arith.constant 0 : index
    %c0_2 = arith.constant 0 : index
    %6 = vector.load %arg1[%c0_1, %c0_2] : memref<27x128xf32, #tpu.memory_space<vmem>>, vector<27x128xf32>
    %cst = arith.constant dense<0.000000e+00> : vector<32x128xf32>
    %7 = tpu.matmul %5, %6, %cst {dimension_numbers = #tpu.dot_dimension_numbers<[1], [0], [0], [1], [0, 0, 1, 1], [], []>} : vector<32x27xf32>, vector<27x128xf32>, vector<32x128xf32> -> vector<32x128xf32>
    %8 = vector.shape_cast %7 : vector<32x128xf32> to vector<2x16x128xf32>
    %c0_3 = arith.constant 0 : index
    %c0_4 = arith.constant 0 : index
    %9 = vector.load %arg3[%c0_3, %c0_4] : memref<1x72xf32, #tpu.memory_space<vmem>>, vector<1x72xf32>
    %10 = vector.extract_strided_slice %8 {offsets = [0, 0, 0], sizes = [2, 14, 16], strides = [1, 1, 1]} : vector<2x16x128xf32> to vector<2x14x16xf32>
    %11 = vector.extract_strided_slice %8 {offsets = [0, 1, 16], sizes = [2, 14, 16], strides = [1, 1, 1]} : vector<2x16x128xf32> to vector<2x14x16xf32>
    %12 = arith.addf %10, %11 : vector<2x14x16xf32>
    %13 = vector.extract_strided_slice %8 {offsets = [0, 2, 32], sizes = [2, 14, 16], strides = [1, 1, 1]} : vector<2x16x128xf32> to vector<2x14x16xf32>
    %14 = arith.addf %12, %13 : vector<2x14x16xf32>
    %15 = vector.extract_strided_slice %9 {offsets = [0, 0], sizes = [1, 16], strides = [1, 1]} : vector<1x72xf32> to vector<1x16xf32>
    %16 = vector.shape_cast %15 : vector<1x16xf32> to vector<1x1x16xf32>
    %17 = vector.broadcast %16 : vector<1x1x16xf32> to vector<2x14x16xf32>
    %18 = arith.addf %14, %17 : vector<2x14x16xf32>
    %cst_5 = arith.constant 0.000000e+00 : f32
    %19 = vector.broadcast %cst_5 : f32 to vector<2x14x16xf32>
    %20 = arith.cmpf ogt, %18, %19 : vector<2x14x16xf32>
    %21 = math.exp %18 : vector<2x14x16xf32>
    %cst_6 = arith.constant 1.000000e+00 : f32
    %22 = vector.broadcast %cst_6 : f32 to vector<2x14x16xf32>
    %23 = arith.subf %21, %22 : vector<2x14x16xf32>
    %cst_7 = arith.constant 1.67326319 : f32
    %24 = vector.broadcast %cst_7 : f32 to vector<2x14x16xf32>
    %25 = arith.mulf %24, %23 : vector<2x14x16xf32>
    %26 = arith.select %20, %18, %25 : vector<2x14x16xi1>, vector<2x14x16xf32>
    %cst_8 = arith.constant 1.05070102 : f32
    %27 = vector.broadcast %cst_8 : f32 to vector<2x14x16xf32>
    %28 = arith.mulf %27, %26 : vector<2x14x16xf32>
    %cst_9 = arith.constant dense<0xFF800000> : vector<2x16xf32>
    %29 = vector.multi_reduction <maximumf>, %28, %cst_9 [1] : vector<2x14x16xf32> to vector<2x16xf32>
    %30 = vector.extract_strided_slice %8 {offsets = [0, 0, 48], sizes = [2, 12, 16], strides = [1, 1, 1]} : vector<2x16x128xf32> to vector<2x12x16xf32>
    %31 = vector.extract_strided_slice %8 {offsets = [0, 1, 64], sizes = [2, 12, 16], strides = [1, 1, 1]} : vector<2x16x128xf32> to vector<2x12x16xf32>
    %32 = arith.addf %30, %31 : vector<2x12x16xf32>
    %33 = vector.extract_strided_slice %8 {offsets = [0, 2, 80], sizes = [2, 12, 16], strides = [1, 1, 1]} : vector<2x16x128xf32> to vector<2x12x16xf32>
    %34 = arith.addf %32, %33 : vector<2x12x16xf32>
    %35 = vector.extract_strided_slice %8 {offsets = [0, 3, 96], sizes = [2, 12, 16], strides = [1, 1, 1]} : vector<2x16x128xf32> to vector<2x12x16xf32>
    %36 = arith.addf %34, %35 : vector<2x12x16xf32>
    %37 = vector.extract_strided_slice %8 {offsets = [0, 4, 112], sizes = [2, 12, 16], strides = [1, 1, 1]} : vector<2x16x128xf32> to vector<2x12x16xf32>
    %38 = arith.addf %36, %37 : vector<2x12x16xf32>
    %39 = vector.extract_strided_slice %9 {offsets = [0, 16], sizes = [1, 16], strides = [1, 1]} : vector<1x72xf32> to vector<1x16xf32>
    %40 = vector.shape_cast %39 : vector<1x16xf32> to vector<1x1x16xf32>
    %41 = vector.broadcast %40 : vector<1x1x16xf32> to vector<2x12x16xf32>
    %42 = arith.addf %38, %41 : vector<2x12x16xf32>
    %cst_10 = arith.constant 0.000000e+00 : f32
    %43 = vector.broadcast %cst_10 : f32 to vector<2x12x16xf32>
    %44 = arith.cmpf ogt, %42, %43 : vector<2x12x16xf32>
    %45 = math.exp %42 : vector<2x12x16xf32>
    %cst_11 = arith.constant 1.000000e+00 : f32
    %46 = vector.broadcast %cst_11 : f32 to vector<2x12x16xf32>
    %47 = arith.subf %45, %46 : vector<2x12x16xf32>
    %cst_12 = arith.constant 1.67326319 : f32
    %48 = vector.broadcast %cst_12 : f32 to vector<2x12x16xf32>
    %49 = arith.mulf %48, %47 : vector<2x12x16xf32>
    %50 = arith.select %44, %42, %49 : vector<2x12x16xi1>, vector<2x12x16xf32>
    %cst_13 = arith.constant 1.05070102 : f32
    %51 = vector.broadcast %cst_13 : f32 to vector<2x12x16xf32>
    %52 = arith.mulf %51, %50 : vector<2x12x16xf32>
    %cst_14 = arith.constant dense<0xFF800000> : vector<2x16xf32>
    %53 = vector.multi_reduction <maximumf>, %52, %cst_14 [1] : vector<2x12x16xf32> to vector<2x16xf32>
    %54 = tpu.concatenate %29, %53 in 1 : vector<2x16xf32>, vector<2x16xf32> -> vector<2x32xf32>
    %c0_15 = arith.constant 0 : index
    %c0_16 = arith.constant 0 : index
    %55 = vector.load %arg2[%c0_15, %c0_16] : memref<64x32xf32, #tpu.memory_space<vmem>>, vector<64x32xf32>
    %56 = vector.extract_strided_slice %55 {offsets = [0, 0], sizes = [32, 32], strides = [1, 1]} : vector<64x32xf32> to vector<32x32xf32>
    %57 = vector.extract_strided_slice %55 {offsets = [32, 0], sizes = [32, 8], strides = [1, 1]} : vector<64x32xf32> to vector<32x8xf32>
    %58 = vector.extract_strided_slice %9 {offsets = [0, 32], sizes = [1, 32], strides = [1, 1]} : vector<1x72xf32> to vector<1x32xf32>
    %59 = vector.extract_strided_slice %9 {offsets = [0, 64], sizes = [1, 8], strides = [1, 1]} : vector<1x72xf32> to vector<1x8xf32>
    %cst_17 = arith.constant dense<0.000000e+00> : vector<2x32xf32>
    %60 = tpu.matmul %54, %56, %cst_17 {dimension_numbers = #tpu.dot_dimension_numbers<[1], [0], [0], [1], [0, 0, 1, 1], [], []>} : vector<2x32xf32>, vector<32x32xf32>, vector<2x32xf32> -> vector<2x32xf32>
    %61 = vector.broadcast %58 : vector<1x32xf32> to vector<2x32xf32>
    %62 = arith.addf %60, %61 : vector<2x32xf32>
    %cst_18 = arith.constant 0.000000e+00 : f32
    %63 = vector.broadcast %cst_18 : f32 to vector<2x32xf32>
    %64 = arith.cmpf ogt, %62, %63 : vector<2x32xf32>
    %65 = math.exp %62 : vector<2x32xf32>
    %cst_19 = arith.constant 1.000000e+00 : f32
    %66 = vector.broadcast %cst_19 : f32 to vector<2x32xf32>
    %67 = arith.subf %65, %66 : vector<2x32xf32>
    %cst_20 = arith.constant 1.67326319 : f32
    %68 = vector.broadcast %cst_20 : f32 to vector<2x32xf32>
    %69 = arith.mulf %68, %67 : vector<2x32xf32>
    %70 = arith.select %64, %62, %69 : vector<2x32xi1>, vector<2x32xf32>
    %cst_21 = arith.constant 1.05070102 : f32
    %71 = vector.broadcast %cst_21 : f32 to vector<2x32xf32>
    %72 = arith.mulf %71, %70 : vector<2x32xf32>
    %cst_22 = arith.constant dense<0.000000e+00> : vector<2x8xf32>
    %73 = tpu.matmul %72, %57, %cst_22 {dimension_numbers = #tpu.dot_dimension_numbers<[1], [0], [0], [1], [0, 0, 1, 1], [], []>} : vector<2x32xf32>, vector<32x8xf32>, vector<2x8xf32> -> vector<2x8xf32>
    %74 = vector.broadcast %59 : vector<1x8xf32> to vector<2x8xf32>
    %75 = arith.addf %73, %74 : vector<2x8xf32>
    %c0_23 = arith.constant 0 : index
    %c0_24 = arith.constant 0 : index
    %76 = vector.load %arg4[%c0_23, %c0_24] : memref<2x8xf32, #tpu.memory_space<vmem>>, vector<2x8xf32>
    tpu.vector_store %arg4[%c0_23, %c0_24], %75 {strides = array<i32>} : memref<2x8xf32, #tpu.memory_space<vmem>>, vector<2x8xf32>,
    return
  }
}

</mosaic_0001>

<llo_original>
// kernel: tpu_custom_call.1
$region0: #{tpu_custom_call.1}
  #allocation0 [shape = 'u32[]', space=smem, size = 0x4, offset = 0x4, fixed_abs, tag = 'smem constant byte address 0x4 - core index']
  #allocation1 [shape = 'u32[144,128]{1,0:T(1,128)}', space=vmem, size = 0x12000, scoped, tag = 'internal scratch']
  %s0 = inlined_call_operand.vmem [shape: s32[32,1], index: 0, kind: input, shape index: {}]
  %s1 = inlined_call_operand.vmem [shape: f32[27,128], index: 1, kind: input, shape index: {}]
  %s2 = inlined_call_operand.vmem [shape: f32[64,32], index: 2, kind: input, shape index: {}]
  %s3 = inlined_call_operand.vmem [shape: f32[1,72], index: 3, kind: input, shape index: {}]
  %s4 = inlined_call_operand.hbm [shape: f32[2,8], index: 4, kind: output, shape index: {}]
  %s5 = sld [smem:[#allocation0]]
  $region26: #{tpu_custom_call.1} parent=0
    _
  %s7 = ssub.s32 1, %s5
  %s8 = scalar_select 0, %s7, %s5
  $region1: #{tpu_custom_call.1} parent=0
    #allocation2 [shape = 'u8[1024]{0}', space=vmem, size = 0x400, scoped, tag = 'output window, operand 0, single buffered']
    #allocation3 [shape = 's32[1]{0}', space=sflag, size = 0x4, scoped, tag = 'scoped memory for tpu_custom_call.1']
    %9 = vsyncpa [#allocation3], 0
    // Predicated region
    $region2: #{tpu_custom_call.1} parent=1 // pred_check
      _
    $region3: #{tpu_custom_call.1} parent=1 // pred_check_branch
      %11 = sbr.rel (0) target = $region5
    $region4: #{tpu_custom_call.1} parent=1 // pred_region
      _
    $region5: #{tpu_custom_call.1} parent=1 // pred_fallthru
      _
    // Predicated region
    $region6: #{tpu_custom_call.1} parent=1 // pred_check
      _
    $region7: #{tpu_custom_call.1} parent=1 // pred_check_branch
      %13 = sbr.rel (0) target = $region9
    $region8: #{tpu_custom_call.1} parent=1 // pred_region
      _
    $region9: #{tpu_custom_call.1} parent=1 // pred_fallthru
      _
    // Predicated region
    $region10: #{tpu_custom_call.1} parent=1 // pred_check
      _
    $region11: #{tpu_custom_call.1} parent=1 // pred_check_branch
      %15 = sbr.rel (0) target = $region13
    $region12: #{tpu_custom_call.1} parent=1 // pred_region
      _
    $region13: #{tpu_custom_call.1} parent=1 // pred_fallthru
      _
    // Predicated region
    $region14: #{tpu_custom_call.1} parent=1 // pred_check
      _
    $region15: #{tpu_custom_call.1} parent=1 // pred_check_branch
      %17 = sbr.rel (0) target = $region17
    $region16: #{tpu_custom_call.1} parent=1 // pred_region
      _
    $region17: #{tpu_custom_call.1} parent=1 // pred_fallthru
      _
    %v18 = vld [vmem:[%s0] sm:$0xff]
    %v19 = vld [vmem:[%s0 + $0x8] sm:$0xff]
    %v20 = vld [vmem:[%s0 + $0x10] sm:$0xff]
    %v21 = vld [vmem:[%s0 + $0x18] sm:$0xff]
    %v22 = vlaneseq
    %v23 = vand.u32 %v22, 127
    %24 = vset.pattern.permute.xlu0 0
    %25 = vperm.xlu0 %24, %v18
    %v26 = vpop.permute.xlu0 %25
    %27 = vset.pattern.permute.xlu0 0
    %28 = vperm.xlu0 %27, %v19
    %v29 = vpop.permute.xlu0 %28
    %30 = vset.pattern.permute.xlu0 0
    %31 = vperm.xlu0 %30, %v20
    %v32 = vpop.permute.xlu0 %31
    %33 = vset.pattern.permute.xlu0 0
    %34 = vperm.xlu0 %33, %v21
    %v35 = vpop.permute.xlu0 %34
    %vm36 = vcmp.eq.s32.totalorder %v26, %v23
    %vm37 = vcmp.eq.s32.totalorder %v29, %v23
    %vm38 = vcmp.eq.s32.totalorder %v32, %v23
    %vm39 = vcmp.eq.s32.totalorder %v35, %v23
    %v40 = vsel %vm36, 1, 0
    %v41 = vsel %vm37, 1, 0
    %v42 = vsel %vm38, 1, 0
    %v43 = vsel %vm39, 1, 0
    %v44 = vcvt.s32.f32 %v40
    %v45 = vcvt.s32.f32 %v41
    %v46 = vcvt.s32.f32 %v42
    %v47 = vcvt.s32.f32 %v43
    %v48 = vld [vmem:[%s1] sm:$0xff]
    %v49 = vld [vmem:[%s1 + $0x8] sm:$0xff]
    %v50 = vld [vmem:[%s1 + $0x10] sm:$0xff]
    %v51 = vld [vmem:[%s1 + $0x18] sm:$0x7]
    %vm52 = vcmask 220160
    %v54 = vsel %vm52, %v44, 0
    %v57 = vsel %vm52, %v45, 0
    %v60 = vsel %vm52, %v46, 0
    %v63 = vsel %vm52, %v47, 0
    %vm65 = vcmask 1042432
    %v67 = vsel %vm65, %v51, 0
    %69 = vmatprep.subr.mxu0 0.0
    %70 = vmatpush1.msra.mxu0 %v48
    %71 = vmatprep.subr.mxu0 0.0
    %72 = vmatpush1.msra.mxu0 %v49
    %73 = vmatprep.subr.mxu0 0.0
    %74 = vmatpush1.msra.mxu0 %v50
    %75 = vmatprep.subr.mxu0 0.0
    %76 = vmatpush1.msra.mxu0 %v67
    %77 = vmatprep.subr.mxu0 0.0
    %78 = vmatpush1.msra.mxu0 0.0
    %79 = vmatprep.subr.mxu0 0.0
    %80 = vmatpush1.msra.mxu0 0.0
    %81 = vmatprep.subr.mxu0 0.0
    %82 = vmatpush1.msra.mxu0 0.0
    %83 = vmatprep.subr.mxu0 0.0
    %84 = vmatpush1.msra.mxu0 0.0
    %85 = vmatprep.subr.mxu0 0.0
    %86 = vmatpush1.msra.mxu0 0.0
    %87 = vmatprep.subr.mxu0 0.0
    %88 = vmatpush1.msra.mxu0 0.0
    %89 = vmatprep.subr.mxu0 0.0
    %90 = vmatpush1.msra.mxu0 0.0
    %91 = vmatprep.subr.mxu0 0.0
    %92 = vmatpush1.msra.mxu0 0.0
    %93 = vmatprep.subr.mxu0 0.0
    %94 = vmatpush1.msra.mxu0 0.0
    %95 = vmatprep.subr.mxu0 0.0
    %96 = vmatpush1.msra.mxu0 0.0
    %97 = vmatprep.subr.mxu0 0.0
    %98 = vmatpush1.msra.mxu0 0.0
    %99 = vmatprep.subr.mxu0 0.0
    %100 = vmatpush1.msra.mxu0 0.0
    %101 = vmatprep.subr.mxu0 0.0
    %102 = vmatpush1.msra.mxu0 0.0
    %103 = vmatprep.subr.mxu0 0.0
    %104 = vmatpush1.msra.mxu0 0.0
    %105 = vmatprep.subr.mxu0 0.0
    %106 = vmatpush1.msra.mxu0 0.0
    %107 = vmatprep.subr.mxu0 0.0
    %108 = vmatpush1.msra.mxu0 0.0
    %109 = vmatprep.subr.mxu0 0.0
    %110 = vmatpush1.msra.mxu0 0.0
    %111 = vmatprep.subr.mxu0 0.0
    %112 = vmatpush1.msra.mxu0 0.0
    %113 = vmatprep.subr.mxu0 0.0
    %114 = vmatpush1.msra.mxu0 0.0
    %115 = vmatprep.subr.mxu0 0.0
    %116 = vmatpush1.msra.mxu0 0.0
    %117 = vmatprep.subr.mxu0 0.0
    %118 = vmatpush1.msra.mxu0 0.0
    %119 = vmatprep.subr.mxu0 0.0
    %120 = vmatpush1.msra.mxu0 0.0
    %121 = vmatprep.subr.mxu0 0.0
    %122 = vmatpush1.msra.mxu0 0.0
    %123 = vmatprep.subr.mxu0 0.0
    %124 = vmatpush1.msra.mxu0 0.0
    %125 = vmatprep.subr.mxu0 0.0
    %126 = vmatpush1.msra.mxu0 0.0
    %127 = vmatprep.subr.mxu0 0.0
    %128 = vmatpush1.msra.mxu0 0.0
    %129 = vmatprep.subr.mxu0 0.0
    %130 = vmatpush1.msra.mxu0 0.0
    %131 = vmatprep.subr.mxu0 0.0
    %132 = vmatpush1.msra.mxu0 0.0
    %133 = vmatprep.mubr.f32.mxu0 0.0
    %134 = vmatmul.mubr.f32.gmra.mrb[0].mxu0 %v54
    %v135 = vpop.f32.mrb[0].mxu0
    %v136 = vadd.f32 0.0, %v135
    %v137 = vpop.f32.mrb[0].mxu0
    %138 = vmatprep.mubr.f32.mxu0 0.0
    %139 = vmatmul.mubr.f32.gmra.mrb[0].mxu0 %v57
    %v140 = vpop.f32.mrb[0].mxu0
    %v141 = vadd.f32 0.0, %v140
    %v142 = vpop.f32.mrb[0].mxu0
    %143 = vmatprep.mubr.f32.mxu0 0.0
    %144 = vmatmul.mubr.f32.gmra.mrb[0].mxu0 %v60
    %v145 = vpop.f32.mrb[0].mxu0
    %v146 = vadd.f32 0.0, %v145
    %v147 = vpop.f32.mrb[0].mxu0
    %148 = vmatprep.mubr.f32.mxu0 0.0
    %149 = vmatmul.mubr.f32.gmra.mrb[0].mxu0 %v63
    %v150 = vpop.f32.mrb[0].mxu0
    %v151 = vadd.f32 0.0, %v150
    %v152 = vpop.f32.mrb[0].mxu0
    %153 = vdwg.mxu0
    %v154 = vld [vmem:[%s3] sm:$0x1]
    %vm159 = vcmask 1046528
    %v160 = vrot.slane %v136, 1
    %v161 = vrot.slane %v141, 1
    %v162 = vsel %vm159, %v160, %v161
    %v163 = vrot.slane %v146, 1
    %v164 = vrot.slane %v151, 1
    %v165 = vsel %vm159, %v163, %v164
    %166 = vrot.lane.b32.xlu0 %v162, 112
    %v167 = vpop.permute.xlu0 %166
    %168 = vrot.lane.b32.xlu0 %v161, 112
    %v169 = vpop.permute.xlu0 %168
    %170 = vrot.lane.b32.xlu0 %v165, 112
    %v171 = vpop.permute.xlu0 %170
    %172 = vrot.lane.b32.xlu0 %v164, 112
    %v173 = vpop.permute.xlu0 %172
    %v178 = vadd.f32 %v136, %v167
    %v179 = vadd.f32 %v141, %v169
    %v180 = vadd.f32 %v146, %v171
    %v181 = vadd.f32 %v151, %v173
    %vm182 = vcmask 1045504
    %v183 = vrot.slane %v136, 2
    %v184 = vrot.slane %v141, 2
    %v185 = vsel %vm182, %v183, %v184
    %v186 = vrot.slane %v146, 2
    %v187 = vrot.slane %v151, 2
    %v188 = vsel %vm182, %v186, %v187
    %189 = vrot.lane.b32.xlu0 %v185, 96
    %v190 = vpop.permute.xlu0 %189
    %191 = vrot.lane.b32.xlu0 %v184, 96
    %v192 = vpop.permute.xlu0 %191
    %193 = vrot.lane.b32.xlu0 %v188, 96
    %v194 = vpop.permute.xlu0 %193
    %195 = vrot.lane.b32.xlu0 %v187, 96
    %v196 = vpop.permute.xlu0 %195
    %v201 = vadd.f32 %v178, %v190
    %v202 = vadd.f32 %v179, %v192
    %v203 = vadd.f32 %v180, %v194
    %v204 = vadd.f32 %v181, %v196
    %v206 = vlaneseq
    %v207 = vshrl.u32 %v206, 7
    %v208 = vsub.s32 0, %v207
    %v209 = vrot.slane %v154, %v208
    %v211 = vadd.f32 %v201, %v209
    %v212 = vadd.f32 %v202, %v209
    %v213 = vadd.f32 %v203, %v209
    %v214 = vadd.f32 %v204, %v209
    %vm215 = vcmp.gt.f32.partialorder %v211, 0.0
    %vm216 = vcmp.gt.f32.partialorder %v212, 0.0
    %vm217 = vcmp.gt.f32.partialorder %v213, 0.0
    %vm218 = vcmp.gt.f32.partialorder %v214, 0.0
    %v219 = vmul.f32 %v211, 1.442695
    %v220 = vpow.pop %v219
    %v221 = vmul.f32 %v212, 1.442695
    %v222 = vpow.pop %v221
    %v223 = vmul.f32 %v213, 1.442695
    %v224 = vpow.pop %v223
    %v225 = vmul.f32 %v214, 1.442695
    %v226 = vpow.pop %v225
    %v227 = vsub.f32 %v220, 1.0
    %v228 = vsub.f32 %v222, 1.0
    %v229 = vsub.f32 %v224, 1.0
    %v230 = vsub.f32 %v226, 1.0
    %v231 = vmul.f32 %v227, 1.6732632
    %v232 = vmul.f32 %v228, 1.6732632
    %v233 = vmul.f32 %v229, 1.6732632
    %v234 = vmul.f32 %v230, 1.6732632
    %v235 = vsel %vm215, %v211, %v231
    %v236 = vsel %vm216, %v212, %v232
    %v237 = vsel %vm217, %v213, %v233
    %v238 = vsel %vm218, %v214, %v234
    %v239 = vmul.f32 %v235, 1.050701
    %v240 = vmul.f32 %v236, 1.050701
    %v241 = vmul.f32 %v237, 1.050701
    %v242 = vmul.f32 %v238, 1.050701
    %vm243 = vcmask 130048
    %v244 = vsel %vm243, %v239, -inf
    %vm245 = vcmask 128000
    %v246 = vsel %vm245, %v240, -inf
    %v247 = vmax.f32 %v244, %v246
    %v248 = vrot.slane %v247, 4
    %v249 = vmax.f32 %v247, %v248
    %v250 = vrot.slane %v249, 2
    %v251 = vmax.f32 %v249, %v250
    %v252 = vrot.slane %v251, 1
    %v253 = vmax.f32 %v251, %v252
    %v254 = vsel %vm243, %v241, -inf
    %v255 = vsel %vm245, %v242, -inf
    %v256 = vmax.f32 %v254, %v255
    %v257 = vrot.slane %v256, 4
    %v258 = vmax.f32 %v256, %v257
    %v259 = vrot.slane %v258, 2
    %v260 = vmax.f32 %v258, %v259
    %v261 = vrot.slane %v260, 1
    %v262 = vmax.f32 %v260, %v261
    %vm263 = vcmask 1044480
    %v264 = vrot.slane %v136, 3
    %v265 = vrot.slane %v141, 3
    %v266 = vsel %vm263, %v264, %v265
    %v267 = vrot.slane %v146, 3
    %v268 = vrot.slane %v151, 3
    %v269 = vsel %vm263, %v267, %v268
    %270 = vrot.lane.b32.xlu0 %v266, 80
    %v271 = vpop.permute.xlu0 %270
    %272 = vrot.lane.b32.xlu0 %v265, 80
    %v273 = vpop.permute.xlu0 %272
    %274 = vrot.lane.b32.xlu0 %v269, 80
    %v275 = vpop.permute.xlu0 %274
    %276 = vrot.lane.b32.xlu0 %v268, 80
    %v277 = vpop.permute.xlu0 %276
    %v282 = vadd.f32 %v201, %v271
    %v283 = vadd.f32 %v202, %v273
    %v284 = vadd.f32 %v203, %v275
    %v285 = vadd.f32 %v204, %v277
    %vm286 = vcmask 1043456
    %v287 = vrot.slane %v136, 4
    %v288 = vrot.slane %v141, 4
    %v289 = vsel %vm286, %v287, %v288
    %v290 = vrot.slane %v146, 4
    %v291 = vrot.slane %v151, 4
    %v292 = vsel %vm286, %v290, %v291
    %293 = vrot.lane.b32.xlu0 %v289, 64
    %v294 = vpop.permute.xlu0 %293
    %295 = vrot.lane.b32.xlu0 %v288, 64
    %v296 = vpop.permute.xlu0 %295
    %297 = vrot.lane.b32.xlu0 %v292, 64
    %v298 = vpop.permute.xlu0 %297
    %299 = vrot.lane.b32.xlu0 %v291, 64
    %v300 = vpop.permute.xlu0 %299
    %v305 = vadd.f32 %v282, %v294
    %v306 = vadd.f32 %v283, %v296
    %v307 = vadd.f32 %v284, %v298
    %v308 = vadd.f32 %v285, %v300
    %309 = vrot.lane.b32.xlu0 %v209, 32
    %v310 = vpop.permute.xlu0 %309
    %v312 = vadd.f32 %v305, %v310
    %v313 = vadd.f32 %v306, %v310
    %v314 = vadd.f32 %v307, %v310
    %v315 = vadd.f32 %v308, %v310
    %vm316 = vcmp.gt.f32.partialorder %v312, 0.0
    %vm317 = vcmp.gt.f32.partialorder %v313, 0.0
    %vm318 = vcmp.gt.f32.partialorder %v314, 0.0
    %vm319 = vcmp.gt.f32.partialorder %v315, 0.0
    %v320 = vmul.f32 %v312, 1.442695
    %v321 = vpow.pop %v320
    %v322 = vmul.f32 %v313, 1.442695
    %v323 = vpow.pop %v322
    %v324 = vmul.f32 %v314, 1.442695
    %v325 = vpow.pop %v324
    %v326 = vmul.f32 %v315, 1.442695
    %v327 = vpow.pop %v326
    %v328 = vsub.f32 %v321, 1.0
    %v329 = vsub.f32 %v323, 1.0
    %v330 = vsub.f32 %v325, 1.0
    %v331 = vsub.f32 %v327, 1.0
    %v332 = vmul.f32 %v328, 1.6732632
    %v333 = vmul.f32 %v329, 1.6732632
    %v334 = vmul.f32 %v330, 1.6732632
    %v335 = vmul.f32 %v331, 1.6732632
    %v336 = vsel %vm316, %v312, %v332
    %v337 = vsel %vm317, %v313, %v333
    %v338 = vsel %vm318, %v314, %v334
    %v339 = vsel %vm319, %v315, %v335
    %v340 = vmul.f32 %v336, 1.050701
    %v341 = vmul.f32 %v337, 1.050701
    %v342 = vmul.f32 %v338, 1.050701
    %v343 = vmul.f32 %v339, 1.050701
    %vm344 = vcmask 523648
    %v345 = vsel %vm344, %v340, -inf
    %vm346 = vcmask 519552
    %v347 = vsel %vm346, %v341, -inf
    %v348 = vmax.f32 %v345, %v347
    %v349 = vrot.slane %v348, 4
    %v350 = vmax.f32 %v348, %v349
    %v351 = vrot.slane %v350, 2
    %v352 = vmax.f32 %v350, %v351
    %v353 = vrot.slane %v352, 1
    %v354 = vmax.f32 %v352, %v353
    %v355 = vsel %vm344, %v342, -inf
    %v356 = vsel %vm346, %v343, -inf
    %v357 = vmax.f32 %v355, %v356
    %v358 = vrot.slane %v357, 4
    %v359 = vmax.f32 %v357, %v358
    %v360 = vrot.slane %v359, 2
    %v361 = vmax.f32 %v359, %v360
    %v362 = vrot.slane %v361, 1
    %v363 = vmax.f32 %v361, %v362
    %vm366 = vcmask 1041409
    %v367 = vsel %vm366, %v262, %v253
    %v371 = vsel %vm366, %v363, %v354
    %372 = vrot.lane.b32.xlu0 %v371, 96
    %v373 = vpop.permute.xlu0 %372
    %v375 = vsel %vm243, %v367, %v373
    %v376 = vld [vmem:[%s2] sm:$0xff]
    %v377 = vld [vmem:[%s2 + $0x8] sm:$0xff]
    %v378 = vld [vmem:[%s2 + $0x10] sm:$0xff]
    %v379 = vld [vmem:[%s2 + $0x18] sm:$0xff]
    %v380 = vld [vmem:[%s2 + $0x20] sm:$0xff]
    %v381 = vld [vmem:[%s2 + $0x28] sm:$0xff]
    %v382 = vld [vmem:[%s2 + $0x30] sm:$0xff]
    %v383 = vld [vmem:[%s2 + $0x38] sm:$0xff]
    %384 = vrot.lane.b32.xlu0 %v209, 96
    %v385 = vpop.permute.xlu0 %384
    %vm387 = vcmask 261120
    %v389 = vsel %vm387, %v375, 0
    %391 = vmatprep.subr.mxu0 0.0
    %392 = vmatpush1.msra.mxu0 %v376
    %393 = vmatprep.subr.mxu0 0.0
    %394 = vmatpush1.msra.mxu0 %v377
    %395 = vmatprep.subr.mxu0 0.0
    %396 = vmatpush1.msra.mxu0 %v378
    %397 = vmatprep.subr.mxu0 0.0
    %398 = vmatpush1.msra.mxu0 %v379
    %399 = vmatprep.subr.mxu0 0.0
    %400 = vmatpush1.msra.mxu0 0.0
    %401 = vmatprep.subr.mxu0 0.0
    %402 = vmatpush1.msra.mxu0 0.0
    %403 = vmatprep.subr.mxu0 0.0
    %404 = vmatpush1.msra.mxu0 0.0
    %405 = vmatprep.subr.mxu0 0.0
    %406 = vmatpush1.msra.mxu0 0.0
    %407 = vmatprep.subr.mxu0 0.0
    %408 = vmatpush1.msra.mxu0 0.0
    %409 = vmatprep.subr.mxu0 0.0
    %410 = vmatpush1.msra.mxu0 0.0
    %411 = vmatprep.subr.mxu0 0.0
    %412 = vmatpush1.msra.mxu0 0.0
    %413 = vmatprep.subr.mxu0 0.0
    %414 = vmatpush1.msra.mxu0 0.0
    %415 = vmatprep.subr.mxu0 0.0
    %416 = vmatpush1.msra.mxu0 0.0
    %417 = vmatprep.subr.mxu0 0.0
    %418 = vmatpush1.msra.mxu0 0.0
    %419 = vmatprep.subr.mxu0 0.0
    %420 = vmatpush1.msra.mxu0 0.0
    %421 = vmatprep.subr.mxu0 0.0
    %422 = vmatpush1.msra.mxu0 0.0
    %423 = vmatprep.subr.mxu0 0.0
    %424 = vmatpush1.msra.mxu0 0.0
    %425 = vmatprep.subr.mxu0 0.0
    %426 = vmatpush1.msra.mxu0 0.0
    %427 = vmatprep.subr.mxu0 0.0
    %428 = vmatpush1.msra.mxu0 0.0
    %429 = vmatprep.subr.mxu0 0.0
    %430 = vmatpush1.msra.mxu0 0.0
    %431 = vmatprep.subr.mxu0 0.0
    %432 = vmatpush1.msra.mxu0 0.0
    %433 = vmatprep.subr.mxu0 0.0
    %434 = vmatpush1.msra.mxu0 0.0
    %435 = vmatprep.subr.mxu0 0.0
    %436 = vmatpush1.msra.mxu0 0.0
    %437 = vmatprep.subr.mxu0 0.0
    %438 = vmatpush1.msra.mxu0 0.0
    %439 = vmatprep.subr.mxu0 0.0
    %440 = vmatpush1.msra.mxu0 0.0
    %441 = vmatprep.subr.mxu0 0.0
    %442 = vmatpush1.msra.mxu0 0.0
    %443 = vmatprep.subr.mxu0 0.0
    %444 = vmatpush1.msra.mxu0 0.0
    %445 = vmatprep.subr.mxu0 0.0
    %446 = vmatpush1.msra.mxu0 0.0
    %447 = vmatprep.subr.mxu0 0.0
    %448 = vmatpush1.msra.mxu0 0.0
    %449 = vmatprep.subr.mxu0 0.0
    %450 = vmatpush1.msra.mxu0 0.0
    %451 = vmatprep.subr.mxu0 0.0
    %452 = vmatpush1.msra.mxu0 0.0
    %453 = vmatprep.subr.mxu0 0.0
    %454 = vmatpush1.msra.mxu0 0.0
    %455 = vmatprep.mubr.f32.mxu0 0.0
    %456 = vmatmul.mubr.f32.gmra.mrb[0].mxu0 %v389
    %v457 = vpop.f32.mrb[0].mxu0
    %v458 = vadd.f32 %v385, %v457
    %v459 = vpop.f32.mrb[0].mxu0
    %460 = vdwg.mxu0
    %vm461 = vcmp.gt.f32.partialorder %v458, 0.0
    %v462 = vmul.f32 %v458, 1.442695
    %v463 = vpow.pop %v462
    %v464 = vsub.f32 %v463, 1.0
    %v465 = vmul.f32 %v464, 1.6732632
    %v466 = vsel %vm461, %v458, %v465
    %v467 = vmul.f32 %v466, 1.050701
    %468 = vrot.lane.b32.xlu0 %v209, 64
    %v469 = vpop.permute.xlu0 %468
    %v472 = vsel %vm387, %v467, 0
    %474 = vmatprep.subr.mxu0 0.0
    %475 = vmatpush1.msra.mxu0 %v380
    %476 = vmatprep.subr.mxu0 0.0
    %477 = vmatpush1.msra.mxu0 %v381
    %478 = vmatprep.subr.mxu0 0.0
    %479 = vmatpush1.msra.mxu0 %v382
    %480 = vmatprep.subr.mxu0 0.0
    %481 = vmatpush1.msra.mxu0 %v383
    %482 = vmatprep.subr.mxu0 0.0
    %483 = vmatpush1.msra.mxu0 0.0
    %484 = vmatprep.subr.mxu0 0.0
    %485 = vmatpush1.msra.mxu0 0.0
    %486 = vmatprep.subr.mxu0 0.0
    %487 = vmatpush1.msra.mxu0 0.0
    %488 = vmatprep.subr.mxu0 0.0
    %489 = vmatpush1.msra.mxu0 0.0
    %490 = vmatprep.subr.mxu0 0.0
    %491 = vmatpush1.msra.mxu0 0.0
    %492 = vmatprep.subr.mxu0 0.0
    %493 = vmatpush1.msra.mxu0 0.0
    %494 = vmatprep.subr.mxu0 0.0
    %495 = vmatpush1.msra.mxu0 0.0
    %496 = vmatprep.subr.mxu0 0.0
    %497 = vmatpush1.msra.mxu0 0.0
    %498 = vmatprep.subr.mxu0 0.0
    %499 = vmatpush1.msra.mxu0 0.0
    %500 = vmatprep.subr.mxu0 0.0
    %501 = vmatpush1.msra.mxu0 0.0
    %502 = vmatprep.subr.mxu0 0.0
    %503 = vmatpush1.msra.mxu0 0.0
    %504 = vmatprep.subr.mxu0 0.0
    %505 = vmatpush1.msra.mxu0 0.0
    %506 = vmatprep.subr.mxu0 0.0
    %507 = vmatpush1.msra.mxu0 0.0
    %508 = vmatprep.subr.mxu0 0.0
    %509 = vmatpush1.msra.mxu0 0.0
    %510 = vmatprep.subr.mxu0 0.0
    %511 = vmatpush1.msra.mxu0 0.0
    %512 = vmatprep.subr.mxu0 0.0
    %513 = vmatpush1.msra.mxu0 0.0
    %514 = vmatprep.subr.mxu0 0.0
    %515 = vmatpush1.msra.mxu0 0.0
    %516 = vmatprep.subr.mxu0 0.0
    %517 = vmatpush1.msra.mxu0 0.0
    %518 = vmatprep.subr.mxu0 0.0
    %519 = vmatpush1.msra.mxu0 0.0
    %520 = vmatprep.subr.mxu0 0.0
    %521 = vmatpush1.msra.mxu0 0.0
    %522 = vmatprep.subr.mxu0 0.0
    %523 = vmatpush1.msra.mxu0 0.0
    %524 = vmatprep.subr.mxu0 0.0
    %525 = vmatpush1.msra.mxu0 0.0
    %526 = vmatprep.subr.mxu0 0.0
    %527 = vmatpush1.msra.mxu0 0.0
    %528 = vmatprep.subr.mxu0 0.0
    %529 = vmatpush1.msra.mxu0 0.0
    %530 = vmatprep.subr.mxu0 0.0
    %531 = vmatpush1.msra.mxu0 0.0
    %532 = vmatprep.subr.mxu0 0.0
    %533 = vmatpush1.msra.mxu0 0.0
    %534 = vmatprep.subr.mxu0 0.0
    %535 = vmatpush1.msra.mxu0 0.0
    %536 = vmatprep.subr.mxu0 0.0
    %537 = vmatpush1.msra.mxu0 0.0
    %538 = vmatprep.mubr.f32.mxu0 0.0
    %539 = vmatmul.mubr.f32.gmra.mrb[0].mxu0 %v472
    %v540 = vpop.f32.mrb[0].mxu0
    %v541 = vadd.f32 %v469, %v540
    %v542 = vpop.f32.mrb[0].mxu0
    %543 = vdwg.mxu0
    %vm544 = vcmask 58368
    %545 = vst.msk [vmem:[#allocation2] sm:$0x3] %vm544, %v541
    // Predicated region
    $region18: #{tpu_custom_call.1} parent=1 // pred_check
      _
    $region19: #{tpu_custom_call.1} parent=1 // pred_check_branch
      %547 = sbr.rel (0) target = $region21
    $region20: #{tpu_custom_call.1} parent=1 // pred_region
      %s549 = ssub.s32 32, 32
      %550 = vsyncadd [#allocation3], %s549
      %s552 = sshll.u32 [#allocation2], 4
      %s553 = int_to_ptr.vmem [resolvable:$true] %s552
      %555 = dma.vmem_to_hbm [thread:$0]  %s553, 32, %s4, [#allocation3]
    $region21: #{tpu_custom_call.1} parent=1 // pred_fallthru
      _
    // Predicated region
    $region22: #{tpu_custom_call.1} parent=1 // pred_check
      _
    $region23: #{tpu_custom_call.1} parent=1 // pred_check_branch
      %557 = sbr.rel (0) target = $region25
    $region24: #{tpu_custom_call.1} parent=1 // pred_region
      %558 = dma.done [#allocation3], 32
    $region25: #{tpu_custom_call.1} parent=1 // pred_fallthru
      _
    %559 = vsyncpa [#allocation3], 1

</llo_original>
